<compile_context>
chip_gen: v7x
topology: tpu7x:2x2x1
jax: 0.10.0
libtpu: 0.0.40
codegen_flags: <defaults>
</compile_context>

<pallas_src>
import functools

import jax
import jax.numpy as jnp
from jax.experimental import pallas as pl
from jax.experimental.pallas import tpu as pltpu

SMOOTH_FACTOR = 22.0  # cfg.smooth_factor
SMOOTH = True         # cfg.smooth
RETURN_IDX = False    # cfg.return_idx
# TODO(synk): return_idx=True branch (argmin index output) not implemented; only the
#             default smooth bsmin path and the hard-min path are lowered.

_LANE = 128
_SUB = 8
_GROUP = 8                 # primitives per exact-logsumexp group
_TARGET_TILE_ROWS = 256    # 256 * 128 = 32768 points per grid step
_MIN_GRID_STEPS = 8        # keep both v7x TensorCores + pipeline fed


def _sdf_sphere_kernel(r_ref, c_ref, x_ref, o_ref, *, k, smooth, P, group):
    # r_ref: (B*P,)   f32 SMEM  -- radii, exp(log_r) precomputed in wrapper
    # c_ref: (B*3*P,) f32 SMEM  -- centers, b-major then p-major [cx, cy, cz]
    # x_ref: (1, 3, TS, 128)    -- dense tile of query points (coord-split)
    # o_ref: (1, TS, 128)
    b = pl.program_id(0)
    rbase = b * P
    cbase = b * (3 * P)
    f32 = jnp.float32

    x0 = x_ref[0, 0, :, :].astype(f32)   # (TS, 128)
    x1 = x_ref[0, 1, :, :].astype(f32)
    x2 = x_ref[0, 2, :, :].astype(f32)

    def signed_dist(p):
        # Unrolled 3-coordinate distance: full-width VPU ops, no (.., 3) lane axis.
        d0 = x0 - c_ref[cbase + 3 * p + 0]
        d1 = x1 - c_ref[cbase + 3 * p + 1]
        d2 = x2 - c_ref[cbase + 3 * p + 2]
        return jnp.sqrt(d0 * d0 + d1 * d1 + d2 * d2) - r_ref[rbase + p]

    if not smooth:
        out = signed_dist(0)
        for p in range(1, P):
            out = jnp.minimum(out, signed_dist(p))
    else:
        # Chunked (hierarchical) logsumexp over the primitive axis:
        #   per group of `group`: exact max, then 1 exp per primitive;
        #   groups merged online via their (m, s) pair: 2 exps per group.
        m = None
        s = None
        for g0 in range(0, P, group):
            zs = [(-k) * signed_dist(p) for p in range(g0, min(g0 + group, P))]
            mg = zs[0]
            for z in zs[1:]:
                mg = jnp.maximum(mg, z)
            sg = jnp.exp(zs[0] - mg)
            for z in zs[1:]:
                sg = sg + jnp.exp(z - mg)
            if m is None:
                m, s = mg, sg
            else:
                mn = jnp.maximum(m, mg)
                s = s * jnp.exp(m - mn) + sg * jnp.exp(mg - mn)
                m = mn
        out = (m + jnp.log(s)) * (-1.0 / k)

    o_ref[...] = out[None].astype(o_ref.dtype)


def _choose_tile_rows(B, n_rows):
    """Sublane rows (of 128 points) per grid step; always a multiple of 8."""
    nr8 = -(-n_rows // _SUB) * _SUB
    ts = min(_TARGET_TILE_ROWS, nr8)
    # Shrink only to keep >= _MIN_GRID_STEPS total steps (v7x megacore sharding
    # + pipeline overlap), but never below 64 rows (8K points) of work per step.
    while ts > 64 and B * (-(-nr8 // ts)) < _MIN_GRID_STEPS:
        ts //= 2
    return max(_SUB, (ts // _SUB) * _SUB)


def sdf_sphere_forward(a, x, *, k=SMOOTH_FACTOR, smooth=SMOOTH, ts=None):
    """a: (B, P*4) or (B, P, 4); x: (B, N, 3) -> (B, N, 1)."""
    B = a.shape[0]
    a = a.reshape(B, -1, 4)
    P = a.shape[1]
    _, N, _ = x.shape

    # --- scalar parameter tables (tiny, SMEM) --------------------------------
    # Flattened to 1-D (1-D SMEM pads to next_pow2(4N) bytes instead of the
    # 2-D 8x128-word tile blowup); exp(log_r) hoisted out of the grid loop.
    r_flat = jnp.exp(a[:, :, 0].astype(jnp.float32)).reshape(B * P)
    c_flat = a[:, :, 1:4].astype(jnp.float32).reshape(B * 3 * P)

    # --- point-axis layout: (B, N, 3) -> (B, 3, Nr, 128), lane-dense ---------
    # TODO(synk): producing/caching x in (B, 3, N) layout upstream would remove
    #             this one-time HBM round trip (matters most on v5e, small P).
    n_rows = -(-N // _LANE)                 # rows of 128 points needed
    if ts is None:
        ts = _choose_tile_rows(B, n_rows)
    else:
        assert ts % _SUB == 0, "ts must be a multiple of 8 sublane rows"
    Nr = -(-n_rows // ts) * ts              # pad row count to a multiple of ts
    Npad = Nr * _LANE
    xt = jnp.transpose(x, (0, 2, 1))        # (B, 3, N)
    if Npad != N:
        xt = jnp.pad(xt, ((0, 0), (0, 0), (0, Npad - N)))
    xt = xt.reshape(B, 3, Nr, _LANE)

    group = max(1, min(_GROUP, P))
    kernel = functools.partial(
        _sdf_sphere_kernel, k=float(k), smooth=smooth, P=P, group=group)

    # Explicit scoped-VMEM limit: double-buffered IO blocks + per-group live
    # intermediates (mostly relevant for v5e's 16 MiB default scoped limit).
    blk_bytes = 4 * ts * _LANE
    vmem_limit = int(min(64 << 20,
                         max(32 << 20, 2 * blk_bytes * (2 * 3 + 2 + group + 8))))

    out = pl.pallas_call(
        kernel,
        out_shape=jax.ShapeDtypeStruct((B, Nr, _LANE), x.dtype),
        grid_spec=pltpu.PrefetchScalarGridSpec(
            num_scalar_prefetch=0,
            grid=(B, Nr // ts),
            in_specs=[
                pl.BlockSpec(memory_space=pltpu.MemorySpace.SMEM),   # radii   (B*P,)
                pl.BlockSpec(memory_space=pltpu.MemorySpace.SMEM),   # centers (B*3P,)
                pl.BlockSpec((1, 3, ts, _LANE), lambda b, n: (b, 0, n, 0)),
            ],
            out_specs=pl.BlockSpec((1, ts, _LANE), lambda b, n: (b, n, 0)),
        ),
        compiler_params=pltpu.CompilerParams(
            dimension_semantics=("parallel", "parallel"),
            vmem_limit_bytes=vmem_limit),
    )(r_flat, c_flat, xt)

    # (B, Nr, 128) -> (B, Npad) -> drop padding -> (B, N, 1)
    return out.reshape(B, Npad)[:, :N].reshape(B, N, 1)


def _reference(a, x, k=SMOOTH_FACTOR, smooth=SMOOTH):
    a = a.reshape(a.shape[0], -1, 4)
    xe = x[:, :, None, :]                 # (B, N, 1, 3)
    pe = a[:, None, :, :]                 # (B, 1, P, 4)
    logr = pe[..., 0]
    d = jnp.sqrt(jnp.sum((xe - pe[..., 1:4]) ** 2, axis=-1)) - jnp.exp(logr)
    if smooth:
        return -jax.nn.logsumexp(-k * d, axis=-1, keepdims=True) / k
    return jnp.min(d, axis=-1, keepdims=True)


if __name__ == "__main__":
    key = jax.random.PRNGKey(0)
    ka, kx = jax.random.split(key)

    # Small module-consistent shapes: batch=2, P=8 primitives, N=16 query points.
    B, P, N = 2, 8, 16
    a = jax.random.normal(ka, (B, P * 4), dtype=jnp.float32) * 0.5
    x = jax.random.normal(kx, (B, N, 3), dtype=jnp.float32)

    out = jax.block_until_ready(sdf_sphere_forward(a, x))
    ref = _reference(a, x)
    assert out.shape == (B, N, 1)
    assert jnp.allclose(out, ref, atol=1e-5, rtol=1e-5), (
        f"max err {jnp.max(jnp.abs(out - ref))}")

    # Non-aligned shapes: exercises chunked logsumexp (P > group, partial last
    # group), point-axis tail padding, multi-row tiles, and the hard-min path.
    B2, P2, N2 = 2, 20, 5000
    a2 = jax.random.normal(ka, (B2, P2 * 4), dtype=jnp.float32) * 0.5
    x2 = jax.random.normal(kx, (B2, N2, 3), dtype=jnp.float32)

    out2 = jax.block_until_ready(sdf_sphere_forward(a2, x2))
    ref2 = _reference(a2, x2)
    assert out2.shape == (B2, N2, 1)
    assert jnp.allclose(out2, ref2, atol=2e-5, rtol=2e-5), (
        f"max err {jnp.max(jnp.abs(out2 - ref2))}")

    out3 = jax.block_until_ready(sdf_sphere_forward(a2, x2, smooth=False))
    ref3 = _reference(a2, x2, smooth=False)
    assert jnp.allclose(out3, ref3, atol=1e-5, rtol=1e-5), (
        f"max err {jnp.max(jnp.abs(out3 - ref3))}")

    print("KERNEL_OK")
</pallas_src>

<mosaic_0001>
module attributes {stable_mosaic.version = 11 : i64} {
  func.func @_sdf_sphere_kernel(%arg0: i32, %arg1: i32, %arg2: memref<16xf32, #tpu.memory_space<smem>>, %arg3: memref<48xf32, #tpu.memory_space<smem>>, %arg4: memref<1x3x8x128xf32, #tpu.memory_space<vmem>>, %arg5: memref<1x8x128xf32, #tpu.memory_space<vmem>>) attributes {dimension_semantics = [#tpu.dimension_semantics<parallel>, #tpu.dimension_semantics<parallel>], iteration_bounds = array<i64: 2, 1>, scalar_prefetch = 0 : i64, scratch_operands = 0 : i64, tpu.core_type = #tpu.core_type<tc>, window_params = [{transform_indices = @transform_0, window_bounds = array<i64: 16>}, {transform_indices = @transform_1, window_bounds = array<i64: 48>}, {transform_indices = @transform_2, window_bounds = array<i64: 1, 3, 8, 128>}, {transform_indices = @transform_3, window_bounds = array<i64: 1, 8, 128>}]} {
    %c8_i32 = arith.constant 8 : i32
    %0 = arith.muli %arg0, %c8_i32 : i32
    %c24_i32 = arith.constant 24 : i32
    %1 = arith.muli %arg0, %c24_i32 : i32
    %c0 = arith.constant 0 : index
    %c0_0 = arith.constant 0 : index
    %c0_1 = arith.constant 0 : index
    %c0_2 = arith.constant 0 : index
    %2 = vector.load %arg4[%c0, %c0_0, %c0_1, %c0_2] : memref<1x3x8x128xf32, #tpu.memory_space<vmem>>, vector<1x1x8x128xf32>
    %3 = vector.shape_cast %2 : vector<1x1x8x128xf32> to vector<8x128xf32>
    %c0_3 = arith.constant 0 : index
    %c1 = arith.constant 1 : index
    %c0_4 = arith.constant 0 : index
    %c0_5 = arith.constant 0 : index
    %4 = vector.load %arg4[%c0_3, %c1, %c0_4, %c0_5] : memref<1x3x8x128xf32, #tpu.memory_space<vmem>>, vector<1x1x8x128xf32>
    %5 = vector.shape_cast %4 : vector<1x1x8x128xf32> to vector<8x128xf32>
    %c0_6 = arith.constant 0 : index
    %c2 = arith.constant 2 : index
    %c0_7 = arith.constant 0 : index
    %c0_8 = arith.constant 0 : index
    %6 = vector.load %arg4[%c0_6, %c2, %c0_7, %c0_8] : memref<1x3x8x128xf32, #tpu.memory_space<vmem>>, vector<1x1x8x128xf32>
    %7 = vector.shape_cast %6 : vector<1x1x8x128xf32> to vector<8x128xf32>
    %c0_i32 = arith.constant 0 : i32
    %8 = arith.addi %1, %c0_i32 : i32
    %c0_i32_9 = arith.constant 0 : i32
    %9 = arith.addi %8, %c0_i32_9 : i32
    %10 = arith.index_cast %9 : i32 to index
    %11 = memref.load %arg3[%10] : memref<48xf32, #tpu.memory_space<smem>>
    %12 = vector.broadcast %11 : f32 to vector<8x128xf32>
    %13 = arith.subf %3, %12 : vector<8x128xf32>
    %c0_i32_10 = arith.constant 0 : i32
    %14 = arith.addi %1, %c0_i32_10 : i32
    %c1_i32 = arith.constant 1 : i32
    %15 = arith.addi %14, %c1_i32 : i32
    %16 = arith.index_cast %15 : i32 to index
    %17 = memref.load %arg3[%16] : memref<48xf32, #tpu.memory_space<smem>>
    %18 = vector.broadcast %17 : f32 to vector<8x128xf32>
    %19 = arith.subf %5, %18 : vector<8x128xf32>
    %c0_i32_11 = arith.constant 0 : i32
    %20 = arith.addi %1, %c0_i32_11 : i32
    %c2_i32 = arith.constant 2 : i32
    %21 = arith.addi %20, %c2_i32 : i32
    %22 = arith.index_cast %21 : i32 to index
    %23 = memref.load %arg3[%22] : memref<48xf32, #tpu.memory_space<smem>>
    %24 = vector.broadcast %23 : f32 to vector<8x128xf32>
    %25 = arith.subf %7, %24 : vector<8x128xf32>
    %26 = arith.mulf %13, %13 : vector<8x128xf32>
    %27 = arith.mulf %19, %19 : vector<8x128xf32>
    %28 = arith.addf %26, %27 : vector<8x128xf32>
    %29 = arith.mulf %25, %25 : vector<8x128xf32>
    %30 = arith.addf %28, %29 : vector<8x128xf32>
    %31 = math.sqrt %30 : vector<8x128xf32>
    %c0_i32_12 = arith.constant 0 : i32
    %32 = arith.addi %0, %c0_i32_12 : i32
    %33 = arith.index_cast %32 : i32 to index
    %34 = memref.load %arg2[%33] : memref<16xf32, #tpu.memory_space<smem>>
    %35 = vector.broadcast %34 : f32 to vector<8x128xf32>
    %36 = arith.subf %31, %35 : vector<8x128xf32>
    %cst = arith.constant -2.200000e+01 : f32
    %37 = vector.broadcast %cst : f32 to vector<8x128xf32>
    %38 = arith.mulf %37, %36 : vector<8x128xf32>
    %c3_i32 = arith.constant 3 : i32
    %39 = arith.addi %1, %c3_i32 : i32
    %c0_i32_13 = arith.constant 0 : i32
    %40 = arith.addi %39, %c0_i32_13 : i32
    %41 = arith.index_cast %40 : i32 to index
    %42 = memref.load %arg3[%41] : memref<48xf32, #tpu.memory_space<smem>>
    %43 = vector.broadcast %42 : f32 to vector<8x128xf32>
    %44 = arith.subf %3, %43 : vector<8x128xf32>
    %c3_i32_14 = arith.constant 3 : i32
    %45 = arith.addi %1, %c3_i32_14 : i32
    %c1_i32_15 = arith.constant 1 : i32
    %46 = arith.addi %45, %c1_i32_15 : i32
    %47 = arith.index_cast %46 : i32 to index
    %48 = memref.load %arg3[%47] : memref<48xf32, #tpu.memory_space<smem>>
    %49 = vector.broadcast %48 : f32 to vector<8x128xf32>
    %50 = arith.subf %5, %49 : vector<8x128xf32>
    %c3_i32_16 = arith.constant 3 : i32
    %51 = arith.addi %1, %c3_i32_16 : i32
    %c2_i32_17 = arith.constant 2 : i32
    %52 = arith.addi %51, %c2_i32_17 : i32
    %53 = arith.index_cast %52 : i32 to index
    %54 = memref.load %arg3[%53] : memref<48xf32, #tpu.memory_space<smem>>
    %55 = vector.broadcast %54 : f32 to vector<8x128xf32>
    %56 = arith.subf %7, %55 : vector<8x128xf32>
    %57 = arith.mulf %44, %44 : vector<8x128xf32>
    %58 = arith.mulf %50, %50 : vector<8x128xf32>
    %59 = arith.addf %57, %58 : vector<8x128xf32>
    %60 = arith.mulf %56, %56 : vector<8x128xf32>
    %61 = arith.addf %59, %60 : vector<8x128xf32>
    %62 = math.sqrt %61 : vector<8x128xf32>
    %c1_i32_18 = arith.constant 1 : i32
    %63 = arith.addi %0, %c1_i32_18 : i32
    %64 = arith.index_cast %63 : i32 to index
    %65 = memref.load %arg2[%64] : memref<16xf32, #tpu.memory_space<smem>>
    %66 = vector.broadcast %65 : f32 to vector<8x128xf32>
    %67 = arith.subf %62, %66 : vector<8x128xf32>
    %cst_19 = arith.constant -2.200000e+01 : f32
    %68 = vector.broadcast %cst_19 : f32 to vector<8x128xf32>
    %69 = arith.mulf %68, %67 : vector<8x128xf32>
    %c6_i32 = arith.constant 6 : i32
    %70 = arith.addi %1, %c6_i32 : i32
    %c0_i32_20 = arith.constant 0 : i32
    %71 = arith.addi %70, %c0_i32_20 : i32
    %72 = arith.index_cast %71 : i32 to index
    %73 = memref.load %arg3[%72] : memref<48xf32, #tpu.memory_space<smem>>
    %74 = vector.broadcast %73 : f32 to vector<8x128xf32>
    %75 = arith.subf %3, %74 : vector<8x128xf32>
    %c6_i32_21 = arith.constant 6 : i32
    %76 = arith.addi %1, %c6_i32_21 : i32
    %c1_i32_22 = arith.constant 1 : i32
    %77 = arith.addi %76, %c1_i32_22 : i32
    %78 = arith.index_cast %77 : i32 to index
    %79 = memref.load %arg3[%78] : memref<48xf32, #tpu.memory_space<smem>>
    %80 = vector.broadcast %79 : f32 to vector<8x128xf32>
    %81 = arith.subf %5, %80 : vector<8x128xf32>
    %c6_i32_23 = arith.constant 6 : i32
    %82 = arith.addi %1, %c6_i32_23 : i32
    %c2_i32_24 = arith.constant 2 : i32
    %83 = arith.addi %82, %c2_i32_24 : i32
    %84 = arith.index_cast %83 : i32 to index
    %85 = memref.load %arg3[%84] : memref<48xf32, #tpu.memory_space<smem>>
    %86 = vector.broadcast %85 : f32 to vector<8x128xf32>
    %87 = arith.subf %7, %86 : vector<8x128xf32>
    %88 = arith.mulf %75, %75 : vector<8x128xf32>
    %89 = arith.mulf %81, %81 : vector<8x128xf32>
    %90 = arith.addf %88, %89 : vector<8x128xf32>
    %91 = arith.mulf %87, %87 : vector<8x128xf32>
    %92 = arith.addf %90, %91 : vector<8x128xf32>
    %93 = math.sqrt %92 : vector<8x128xf32>
    %c2_i32_25 = arith.constant 2 : i32
    %94 = arith.addi %0, %c2_i32_25 : i32
    %95 = arith.index_cast %94 : i32 to index
    %96 = memref.load %arg2[%95] : memref<16xf32, #tpu.memory_space<smem>>
    %97 = vector.broadcast %96 : f32 to vector<8x128xf32>
    %98 = arith.subf %93, %97 : vector<8x128xf32>
    %cst_26 = arith.constant -2.200000e+01 : f32
    %99 = vector.broadcast %cst_26 : f32 to vector<8x128xf32>
    %100 = arith.mulf %99, %98 : vector<8x128xf32>
    %c9_i32 = arith.constant 9 : i32
    %101 = arith.addi %1, %c9_i32 : i32
    %c0_i32_27 = arith.constant 0 : i32
    %102 = arith.addi %101, %c0_i32_27 : i32
    %103 = arith.index_cast %102 : i32 to index
    %104 = memref.load %arg3[%103] : memref<48xf32, #tpu.memory_space<smem>>
    %105 = vector.broadcast %104 : f32 to vector<8x128xf32>
    %106 = arith.subf %3, %105 : vector<8x128xf32>
    %c9_i32_28 = arith.constant 9 : i32
    %107 = arith.addi %1, %c9_i32_28 : i32
    %c1_i32_29 = arith.constant 1 : i32
    %108 = arith.addi %107, %c1_i32_29 : i32
    %109 = arith.index_cast %108 : i32 to index
    %110 = memref.load %arg3[%109] : memref<48xf32, #tpu.memory_space<smem>>
    %111 = vector.broadcast %110 : f32 to vector<8x128xf32>
    %112 = arith.subf %5, %111 : vector<8x128xf32>
    %c9_i32_30 = arith.constant 9 : i32
    %113 = arith.addi %1, %c9_i32_30 : i32
    %c2_i32_31 = arith.constant 2 : i32
    %114 = arith.addi %113, %c2_i32_31 : i32
    %115 = arith.index_cast %114 : i32 to index
    %116 = memref.load %arg3[%115] : memref<48xf32, #tpu.memory_space<smem>>
    %117 = vector.broadcast %116 : f32 to vector<8x128xf32>
    %118 = arith.subf %7, %117 : vector<8x128xf32>
    %119 = arith.mulf %106, %106 : vector<8x128xf32>
    %120 = arith.mulf %112, %112 : vector<8x128xf32>
    %121 = arith.addf %119, %120 : vector<8x128xf32>
    %122 = arith.mulf %118, %118 : vector<8x128xf32>
    %123 = arith.addf %121, %122 : vector<8x128xf32>
    %124 = math.sqrt %123 : vector<8x128xf32>
    %c3_i32_32 = arith.constant 3 : i32
    %125 = arith.addi %0, %c3_i32_32 : i32
    %126 = arith.index_cast %125 : i32 to index
    %127 = memref.load %arg2[%126] : memref<16xf32, #tpu.memory_space<smem>>
    %128 = vector.broadcast %127 : f32 to vector<8x128xf32>
    %129 = arith.subf %124, %128 : vector<8x128xf32>
    %cst_33 = arith.constant -2.200000e+01 : f32
    %130 = vector.broadcast %cst_33 : f32 to vector<8x128xf32>
    %131 = arith.mulf %130, %129 : vector<8x128xf32>
    %c12_i32 = arith.constant 12 : i32
    %132 = arith.addi %1, %c12_i32 : i32
    %c0_i32_34 = arith.constant 0 : i32
    %133 = arith.addi %132, %c0_i32_34 : i32
    %134 = arith.index_cast %133 : i32 to index
    %135 = memref.load %arg3[%134] : memref<48xf32, #tpu.memory_space<smem>>
    %136 = vector.broadcast %135 : f32 to vector<8x128xf32>
    %137 = arith.subf %3, %136 : vector<8x128xf32>
    %c12_i32_35 = arith.constant 12 : i32
    %138 = arith.addi %1, %c12_i32_35 : i32
    %c1_i32_36 = arith.constant 1 : i32
    %139 = arith.addi %138, %c1_i32_36 : i32
    %140 = arith.index_cast %139 : i32 to index
    %141 = memref.load %arg3[%140] : memref<48xf32, #tpu.memory_space<smem>>
    %142 = vector.broadcast %141 : f32 to vector<8x128xf32>
    %143 = arith.subf %5, %142 : vector<8x128xf32>
    %c12_i32_37 = arith.constant 12 : i32
    %144 = arith.addi %1, %c12_i32_37 : i32
    %c2_i32_38 = arith.constant 2 : i32
    %145 = arith.addi %144, %c2_i32_38 : i32
    %146 = arith.index_cast %145 : i32 to index
    %147 = memref.load %arg3[%146] : memref<48xf32, #tpu.memory_space<smem>>
    %148 = vector.broadcast %147 : f32 to vector<8x128xf32>
    %149 = arith.subf %7, %148 : vector<8x128xf32>
    %150 = arith.mulf %137, %137 : vector<8x128xf32>
    %151 = arith.mulf %143, %143 : vector<8x128xf32>
    %152 = arith.addf %150, %151 : vector<8x128xf32>
    %153 = arith.mulf %149, %149 : vector<8x128xf32>
    %154 = arith.addf %152, %153 : vector<8x128xf32>
    %155 = math.sqrt %154 : vector<8x128xf32>
    %c4_i32 = arith.constant 4 : i32
    %156 = arith.addi %0, %c4_i32 : i32
    %157 = arith.index_cast %156 : i32 to index
    %158 = memref.load %arg2[%157] : memref<16xf32, #tpu.memory_space<smem>>
    %159 = vector.broadcast %158 : f32 to vector<8x128xf32>
    %160 = arith.subf %155, %159 : vector<8x128xf32>
    %cst_39 = arith.constant -2.200000e+01 : f32
    %161 = vector.broadcast %cst_39 : f32 to vector<8x128xf32>
    %162 = arith.mulf %161, %160 : vector<8x128xf32>
    %c15_i32 = arith.constant 15 : i32
    %163 = arith.addi %1, %c15_i32 : i32
    %c0_i32_40 = arith.constant 0 : i32
    %164 = arith.addi %163, %c0_i32_40 : i32
    %165 = arith.index_cast %164 : i32 to index
    %166 = memref.load %arg3[%165] : memref<48xf32, #tpu.memory_space<smem>>
    %167 = vector.broadcast %166 : f32 to vector<8x128xf32>
    %168 = arith.subf %3, %167 : vector<8x128xf32>
    %c15_i32_41 = arith.constant 15 : i32
    %169 = arith.addi %1, %c15_i32_41 : i32
    %c1_i32_42 = arith.constant 1 : i32
    %170 = arith.addi %169, %c1_i32_42 : i32
    %171 = arith.index_cast %170 : i32 to index
    %172 = memref.load %arg3[%171] : memref<48xf32, #tpu.memory_space<smem>>
    %173 = vector.broadcast %172 : f32 to vector<8x128xf32>
    %174 = arith.subf %5, %173 : vector<8x128xf32>
    %c15_i32_43 = arith.constant 15 : i32
    %175 = arith.addi %1, %c15_i32_43 : i32
    %c2_i32_44 = arith.constant 2 : i32
    %176 = arith.addi %175, %c2_i32_44 : i32
    %177 = arith.index_cast %176 : i32 to index
    %178 = memref.load %arg3[%177] : memref<48xf32, #tpu.memory_space<smem>>
    %179 = vector.broadcast %178 : f32 to vector<8x128xf32>
    %180 = arith.subf %7, %179 : vector<8x128xf32>
    %181 = arith.mulf %168, %168 : vector<8x128xf32>
    %182 = arith.mulf %174, %174 : vector<8x128xf32>
    %183 = arith.addf %181, %182 : vector<8x128xf32>
    %184 = arith.mulf %180, %180 : vector<8x128xf32>
    %185 = arith.addf %183, %184 : vector<8x128xf32>
    %186 = math.sqrt %185 : vector<8x128xf32>
    %c5_i32 = arith.constant 5 : i32
    %187 = arith.addi %0, %c5_i32 : i32
    %188 = arith.index_cast %187 : i32 to index
    %189 = memref.load %arg2[%188] : memref<16xf32, #tpu.memory_space<smem>>
    %190 = vector.broadcast %189 : f32 to vector<8x128xf32>
    %191 = arith.subf %186, %190 : vector<8x128xf32>
    %cst_45 = arith.constant -2.200000e+01 : f32
    %192 = vector.broadcast %cst_45 : f32 to vector<8x128xf32>
    %193 = arith.mulf %192, %191 : vector<8x128xf32>
    %c18_i32 = arith.constant 18 : i32
    %194 = arith.addi %1, %c18_i32 : i32
    %c0_i32_46 = arith.constant 0 : i32
    %195 = arith.addi %194, %c0_i32_46 : i32
    %196 = arith.index_cast %195 : i32 to index
    %197 = memref.load %arg3[%196] : memref<48xf32, #tpu.memory_space<smem>>
    %198 = vector.broadcast %197 : f32 to vector<8x128xf32>
    %199 = arith.subf %3, %198 : vector<8x128xf32>
    %c18_i32_47 = arith.constant 18 : i32
    %200 = arith.addi %1, %c18_i32_47 : i32
    %c1_i32_48 = arith.constant 1 : i32
    %201 = arith.addi %200, %c1_i32_48 : i32
    %202 = arith.index_cast %201 : i32 to index
    %203 = memref.load %arg3[%202] : memref<48xf32, #tpu.memory_space<smem>>
    %204 = vector.broadcast %203 : f32 to vector<8x128xf32>
    %205 = arith.subf %5, %204 : vector<8x128xf32>
    %c18_i32_49 = arith.constant 18 : i32
    %206 = arith.addi %1, %c18_i32_49 : i32
    %c2_i32_50 = arith.constant 2 : i32
    %207 = arith.addi %206, %c2_i32_50 : i32
    %208 = arith.index_cast %207 : i32 to index
    %209 = memref.load %arg3[%208] : memref<48xf32, #tpu.memory_space<smem>>
    %210 = vector.broadcast %209 : f32 to vector<8x128xf32>
    %211 = arith.subf %7, %210 : vector<8x128xf32>
    %212 = arith.mulf %199, %199 : vector<8x128xf32>
    %213 = arith.mulf %205, %205 : vector<8x128xf32>
    %214 = arith.addf %212, %213 : vector<8x128xf32>
    %215 = arith.mulf %211, %211 : vector<8x128xf32>
    %216 = arith.addf %214, %215 : vector<8x128xf32>
    %217 = math.sqrt %216 : vector<8x128xf32>
    %c6_i32_51 = arith.constant 6 : i32
    %218 = arith.addi %0, %c6_i32_51 : i32
    %219 = arith.index_cast %218 : i32 to index
    %220 = memref.load %arg2[%219] : memref<16xf32, #tpu.memory_space<smem>>
    %221 = vector.broadcast %220 : f32 to vector<8x128xf32>
    %222 = arith.subf %217, %221 : vector<8x128xf32>
    %cst_52 = arith.constant -2.200000e+01 : f32
    %223 = vector.broadcast %cst_52 : f32 to vector<8x128xf32>
    %224 = arith.mulf %223, %222 : vector<8x128xf32>
    %c21_i32 = arith.constant 21 : i32
    %225 = arith.addi %1, %c21_i32 : i32
    %c0_i32_53 = arith.constant 0 : i32
    %226 = arith.addi %225, %c0_i32_53 : i32
    %227 = arith.index_cast %226 : i32 to index
    %228 = memref.load %arg3[%227] : memref<48xf32, #tpu.memory_space<smem>>
    %229 = vector.broadcast %228 : f32 to vector<8x128xf32>
    %230 = arith.subf %3, %229 : vector<8x128xf32>
    %c21_i32_54 = arith.constant 21 : i32
    %231 = arith.addi %1, %c21_i32_54 : i32
    %c1_i32_55 = arith.constant 1 : i32
    %232 = arith.addi %231, %c1_i32_55 : i32
    %233 = arith.index_cast %232 : i32 to index
    %234 = memref.load %arg3[%233] : memref<48xf32, #tpu.memory_space<smem>>
    %235 = vector.broadcast %234 : f32 to vector<8x128xf32>
    %236 = arith.subf %5, %235 : vector<8x128xf32>
    %c21_i32_56 = arith.constant 21 : i32
    %237 = arith.addi %1, %c21_i32_56 : i32
    %c2_i32_57 = arith.constant 2 : i32
    %238 = arith.addi %237, %c2_i32_57 : i32
    %239 = arith.index_cast %238 : i32 to index
    %240 = memref.load %arg3[%239] : memref<48xf32, #tpu.memory_space<smem>>
    %241 = vector.broadcast %240 : f32 to vector<8x128xf32>
    %242 = arith.subf %7, %241 : vector<8x128xf32>
    %243 = arith.mulf %230, %230 : vector<8x128xf32>
    %244 = arith.mulf %236, %236 : vector<8x128xf32>
    %245 = arith.addf %243, %244 : vector<8x128xf32>
    %246 = arith.mulf %242, %242 : vector<8x128xf32>
    %247 = arith.addf %245, %246 : vector<8x128xf32>
    %248 = math.sqrt %247 : vector<8x128xf32>
    %c7_i32 = arith.constant 7 : i32
    %249 = arith.addi %0, %c7_i32 : i32
    %250 = arith.index_cast %249 : i32 to index
    %251 = memref.load %arg2[%250] : memref<16xf32, #tpu.memory_space<smem>>
    %252 = vector.broadcast %251 : f32 to vector<8x128xf32>
    %253 = arith.subf %248, %252 : vector<8x128xf32>
    %cst_58 = arith.constant -2.200000e+01 : f32
    %254 = vector.broadcast %cst_58 : f32 to vector<8x128xf32>
    %255 = arith.mulf %254, %253 : vector<8x128xf32>
    %256 = arith.maximumf %38, %69 : vector<8x128xf32>
    %257 = arith.maximumf %256, %100 : vector<8x128xf32>
    %258 = arith.maximumf %257, %131 : vector<8x128xf32>
    %259 = arith.maximumf %258, %162 : vector<8x128xf32>
    %260 = arith.maximumf %259, %193 : vector<8x128xf32>
    %261 = arith.maximumf %260, %224 : vector<8x128xf32>
    %262 = arith.maximumf %261, %255 : vector<8x128xf32>
    %263 = arith.subf %38, %262 : vector<8x128xf32>
    %264 = math.exp %263 : vector<8x128xf32>
    %265 = arith.subf %69, %262 : vector<8x128xf32>
    %266 = math.exp %265 : vector<8x128xf32>
    %267 = arith.addf %264, %266 : vector<8x128xf32>
    %268 = arith.subf %100, %262 : vector<8x128xf32>
    %269 = math.exp %268 : vector<8x128xf32>
    %270 = arith.addf %267, %269 : vector<8x128xf32>
    %271 = arith.subf %131, %262 : vector<8x128xf32>
    %272 = math.exp %271 : vector<8x128xf32>
    %273 = arith.addf %270, %272 : vector<8x128xf32>
    %274 = arith.subf %162, %262 : vector<8x128xf32>
    %275 = math.exp %274 : vector<8x128xf32>
    %276 = arith.addf %273, %275 : vector<8x128xf32>
    %277 = arith.subf %193, %262 : vector<8x128xf32>
    %278 = math.exp %277 : vector<8x128xf32>
    %279 = arith.addf %276, %278 : vector<8x128xf32>
    %280 = arith.subf %224, %262 : vector<8x128xf32>
    %281 = math.exp %280 : vector<8x128xf32>
    %282 = arith.addf %279, %281 : vector<8x128xf32>
    %283 = arith.subf %255, %262 : vector<8x128xf32>
    %284 = math.exp %283 : vector<8x128xf32>
    %285 = arith.addf %282, %284 : vector<8x128xf32>
    %286 = math.log %285 : vector<8x128xf32>
    %287 = arith.addf %262, %286 : vector<8x128xf32>
    %cst_59 = arith.constant -0.0454545468 : f32
    %288 = vector.broadcast %cst_59 : f32 to vector<8x128xf32>
    %289 = arith.mulf %287, %288 : vector<8x128xf32>
    %290 = vector.shape_cast %289 : vector<8x128xf32> to vector<1x8x128xf32>
    %c0_60 = arith.constant 0 : index
    %c0_61 = arith.constant 0 : index
    %c0_62 = arith.constant 0 : index
    %291 = vector.load %arg5[%c0_60, %c0_61, %c0_62] : memref<1x8x128xf32, #tpu.memory_space<vmem>>, vector<1x8x128xf32>
    tpu.vector_store %arg5[%c0_60, %c0_61, %c0_62], %290 {strides = array<i32>} : memref<1x8x128xf32, #tpu.memory_space<vmem>>, vector<1x8x128xf32>,
    return
  }
  func.func @transform_0(%arg0: i32, %arg1: i32) -> i32 {
    %c0_i32 = arith.constant 0 : i32
    %c0_i32_0 = arith.constant 0 : i32
    return %c0_i32 : i32
  }
  func.func @transform_1(%arg0: i32, %arg1: i32) -> i32 {
    %c0_i32 = arith.constant 0 : i32
    %c0_i32_0 = arith.constant 0 : i32
    return %c0_i32 : i32
  }
  func.func @transform_2(%arg0: i32, %arg1: i32) -> (i32, i32, i32, i32) {
    %c0_i32 = arith.constant 0 : i32
    %c0_i32_0 = arith.constant 0 : i32
    %c0_i32_1 = arith.constant 0 : i32
    return %arg0, %c0_i32, %arg1, %c0_i32_0 : i32, i32, i32, i32
  }
  func.func @transform_3(%arg0: i32, %arg1: i32) -> (i32, i32, i32) {
    %c0_i32 = arith.constant 0 : i32
    %c0_i32_0 = arith.constant 0 : i32
    return %arg0, %arg1, %c0_i32 : i32, i32, i32
  }
}

</mosaic_0001>

<llo_original>
// kernel: tpu_custom_call.1
$region0: #{tpu_custom_call.1}
  #allocation0 [shape = 'u32[]', space=smem, size = 0x4, offset = 0x4, fixed_abs, tag = 'smem constant byte address 0x4 - core index']
  #allocation1 [shape = 'u32[144,128]{1,0:T(1,128)}', space=vmem, size = 0x12000, scoped, tag = 'internal scratch']
  %s0 = inlined_call_operand.hbm [shape: f32[16], index: 0, kind: input, shape index: {}]
  %s1 = inlined_call_operand.vmem [shape: f32[48], index: 1, kind: input, shape index: {}]
  %s2 = inlined_call_operand.hbm [shape: f32[2,3,8,128], index: 2, kind: input, shape index: {}]
  %s3 = inlined_call_operand.hbm [shape: f32[2,8,128], index: 3, kind: output, shape index: {}]
  %s4 = sld [smem:[#allocation0]]
  $region57: #{tpu_custom_call.1} parent=0
    _
  %s6 = ssub.s32 1, %s4
  %s7 = scalar_select 0, %s6, %s4
  $region1: #{tpu_custom_call.1} parent=0
    #allocation2 [shape = 'u8[512]{0}', space=smem, size = 0x200, scoped, tag = 'input window, operand 0, single buffered']
    #allocation3 [shape = 's32[2]{0}', space=sflag, size = 0x8, scoped, tag = 'scoped memory for tpu_custom_call.1']
    #allocation4 [shape = 's32[2]{0}', space=sflag, size = 0x8, scoped, tag = 'scoped memory for tpu_custom_call.1']
    #allocation5 [shape = 's32[2]{0}', space=sflag, size = 0x8, scoped, tag = 'scoped memory for tpu_custom_call.1']
    #allocation6 [shape = 's32[2]{0}', space=sflag, size = 0x8, scoped, tag = 'scoped memory for tpu_custom_call.1']
    #allocation7 [shape = 'u8[512]{0}', space=smem, size = 0x200, scoped, tag = 'input window, operand 1, single buffered']
    #allocation8 [shape = 'u8[24576]{0}', space=vmem, size = 0x6000, scoped, tag = 'input window, operand 2']
    #allocation9 [shape = 'u8[8192]{0}', space=vmem, size = 0x2000, scoped, tag = 'output window, operand 0']
    %8 = vsyncpa [#allocation5], 0
    %9 = vsyncpa [#allocation6], 0
    %10 = vsyncpa [#allocation3], 0
    %s11 = scalar_lea.sflag [#allocation3], 1
    %12 = vsyncpa %s11, 0
    %13 = vsyncpa [#allocation4], 0
    %s14 = scalar_lea.sflag [#allocation4], 1
    %15 = vsyncpa %s14, 0
    loop: start=0, step=1, limit=4
    $region2: #{tpu_custom_call.1} parent=1 // loop_pre_header
      _
    $region3: #{tpu_custom_call.1} parent=1 // loop_header
      %s17 = sphi 0, %s21
      %p18 = scmp.ge.s32.totalorder %s17, 4
      %s24 = sphi 0, %s36
      %s25 = sphi 0, %s32
      %s26 = sphi 0, %s24
      %s27 = sphi 0, %s25
      %s28 = sphi 0, %s26
      %s29 = sphi 0, %s27
      %s37 = sphi 0, %s37
      %s39 = sphi 0, %s37
      %s40 = sphi 0, %s39
      %s54 = sphi 0, %s40
      %s58 = sphi 0, %s58
      %s60 = sphi 0, %s58
      %s61 = sphi 0, %s60
      %s75 = sphi 0, %s61
      %s83 = sphi 0, %s85
      %s86 = sphi 0, %s83
      %s87 = sphi 0, %s86
      %s103 = sphi 0, %s87
      %s111 = sphi 0, %s113
      %s114 = sphi 0, %s111
      %s115 = sphi 0, %s114
      %s131 = sphi 0, %s115
    $region4: #{tpu_custom_call.1} parent=1 // loop_header_branch
      %20 = sbr.rel (%p18) target = $region8
    $region5: #{tpu_custom_call.1} parent=1 // loop_body
      %s22 = ssub.s32 %s17, 1
      %s23 = ssub.s32 %s17, 2
      %s30 = sadd.s32 1, %s25
      %p31 = scmp.ge.s32.totalorder %s30, 1
      %s32 = scalar_select %p31, 0, %s30
      %s33 = sadd.s32 1, %s24
      %s34 = scalar_select %p31, %s33, %s24
      %p35 = scmp.ge.s32.totalorder %s34, 2
      %s36 = scalar_select %p35, 0, %s34
      %s38 = sadd.s32 %s37, 1
      %p41 = scmp.eq.s32.totalorder %s17, 1
      %p42 = scmp.ne.s32.totalorder %s37, %s39
      %p43 = scmp.eq.s32.totalorder %s17, 0
      %p44 = por %p42, %p43
      %p45 = scmp.ne.s32.totalorder %s37, %s39
      %p46 = scmp.eq.s32.totalorder %s22, 1
      %p47 = por %p45, %p46
      %p48 = scmp.ne.s32.totalorder %s39, %s40
      %p49 = scmp.eq.s32.totalorder %s22, 0
      %p50 = por %p48, %p49
      %p51 = scmp.ne.s32.totalorder %s39, %s40
      %p52 = scmp.eq.s32.totalorder %s23, 1
      %p53 = por %p51, %p52
      %p55 = scmp.ne.s32.totalorder %s40, %s54
      %p56 = scmp.eq.s32.totalorder %s23, 0
      %p57 = por %p55, %p56
      %s59 = sadd.s32 %s58, 1
      %p62 = scmp.eq.s32.totalorder %s17, 1
      %p63 = scmp.ne.s32.totalorder %s58, %s60
      %p64 = scmp.eq.s32.totalorder %s17, 0
      %p65 = por %p63, %p64
      %p66 = scmp.ne.s32.totalorder %s58, %s60
      %p67 = scmp.eq.s32.totalorder %s22, 1
      %p68 = por %p66, %p67
      %p69 = scmp.ne.s32.totalorder %s60, %s61
      %p70 = scmp.eq.s32.totalorder %s22, 0
      %p71 = por %p69, %p70
      %p72 = scmp.ne.s32.totalorder %s60, %s61
      %p73 = scmp.eq.s32.totalorder %s23, 1
      %p74 = por %p72, %p73
      %p76 = scmp.ne.s32.totalorder %s61, %s75
      %p77 = scmp.eq.s32.totalorder %s23, 0
      %p78 = por %p76, %p77
      %s79 = ssub.s32 %s24, %s36
      %s80 = ssub.s32 %s25, %s32
      %s81 = sor.u32 %s79, %s80
      %p82 = scmp.eq.s32.totalorder %s81, 0
      %s84 = sadd.s32 %s83, 1
      %s85 = scalar_select %p82, %s83, %s84
      %p88 = pneg %p82
      %p89 = scmp.eq.s32.totalorder %s17, 1
      %p90 = por %p88, %p89
      %p91 = scmp.ne.s32.totalorder %s83, %s86
      %p92 = scmp.eq.s32.totalorder %s17, 0
      %p93 = por %p91, %p92
      %p94 = scmp.ne.s32.totalorder %s83, %s86
      %p95 = scmp.eq.s32.totalorder %s22, 1
      %p96 = por %p94, %p95
      %p97 = scmp.ne.s32.totalorder %s86, %s87
      %p98 = scmp.eq.s32.totalorder %s22, 0
      %p99 = por %p97, %p98
      %p100 = scmp.ne.s32.totalorder %s86, %s87
      %p101 = scmp.eq.s32.totalorder %s23, 1
      %p102 = por %p100, %p101
      %p104 = scmp.ne.s32.totalorder %s87, %s103
      %p105 = scmp.eq.s32.totalorder %s23, 0
      %p106 = por %p104, %p105
      %s107 = ssub.s32 %s24, %s36
      %s108 = ssub.s32 %s25, %s32
      %s109 = sor.u32 %s107, %s108
      %p110 = scmp.eq.s32.totalorder %s109, 0
      %s112 = sadd.s32 %s111, 1
      %s113 = scalar_select %p110, %s111, %s112
      %p116 = pneg %p110
      %p117 = scmp.eq.s32.totalorder %s17, 1
      %p118 = por %p116, %p117
      %p119 = scmp.ne.s32.totalorder %s111, %s114
      %p120 = scmp.eq.s32.totalorder %s17, 0
      %p121 = por %p119, %p120
      %p122 = scmp.ne.s32.totalorder %s111, %s114
      %p123 = scmp.eq.s32.totalorder %s22, 1
      %p124 = por %p122, %p123
      %p125 = scmp.ne.s32.totalorder %s114, %s115
      %p126 = scmp.eq.s32.totalorder %s22, 0
      %p127 = por %p125, %p126
      %p128 = scmp.ne.s32.totalorder %s114, %s115
      %p129 = scmp.eq.s32.totalorder %s23, 1
      %p130 = por %p128, %p129
      %p132 = scmp.ne.s32.totalorder %s115, %s131
      %p133 = scmp.eq.s32.totalorder %s23, 0
      %p134 = por %p132, %p133
      %p135 = scmp.le.s32.totalorder 1, %s17
      %p136 = scmp.lt.s32.totalorder %s17, 3
      %p137 = pnand %p135, %p136
      %p138 = pneg %p137
      // Predicated region
      $region9: #{tpu_custom_call.1} parent=5 // pred_check
        _
      $region10: #{tpu_custom_call.1} parent=5 // pred_check_branch
        %140 = sbr.rel (%p137) target = $region12
      $region11: #{tpu_custom_call.1} parent=5 // pred_region
        %s141 = ssub.s32 %s17, 1
        // Predicated region
        $region13: #{tpu_custom_call.1} parent=11 // pred_check
          %p142 = pneg %p50
        $region14: #{tpu_custom_call.1} parent=11 // pred_check_branch
          %144 = sbr.rel (%p142) target = $region16
        $region15: #{tpu_custom_call.1} parent=11 // pred_region
          %s146 = ssub.s32 16, 16
          %147 = vsyncadd [#allocation5], %s146
          %150 = dma.hbm_to_smem %s0, 16, [#allocation2], [#allocation5]
        $region16: #{tpu_custom_call.1} parent=11 // pred_fallthru
          _
        // Predicated region
        $region17: #{tpu_custom_call.1} parent=11 // pred_check
          %p151 = pneg %p71
        $region18: #{tpu_custom_call.1} parent=11 // pred_check_branch
          %153 = sbr.rel (%p151) target = $region20
        $region19: #{tpu_custom_call.1} parent=11 // pred_region
          %s155 = ssub.s32 16, 16
          %156 = vsyncadd [#allocation6], %s155
          %s158 = sshll.u32 %s1, 4
          %s159 = int_to_ptr.vmem [resolvable:$true] %s158
          %161 = dma.vmem_to_smem %s159, 16, [#allocation7], [#allocation6]
        $region20: #{tpu_custom_call.1} parent=11 // pred_fallthru
          _
      $region12: #{tpu_custom_call.1} parent=5 // pred_fallthru
        _
      %p162 = scmp.lt.s32.totalorder %s17, 2
      // Predicated region
      $region21: #{tpu_custom_call.1} parent=5 // pred_check
        %p163 = pneg %p162
      $region22: #{tpu_custom_call.1} parent=5 // pred_check_branch
        %165 = sbr.rel (%p163) target = $region24
      $region23: #{tpu_custom_call.1} parent=5 // pred_region
        // Predicated region
        $region25: #{tpu_custom_call.1} parent=23 // pred_check
          %p166 = pneg %p93
        $region26: #{tpu_custom_call.1} parent=23 // pred_check_branch
          %168 = sbr.rel (%p166) target = $region28
        $region27: #{tpu_custom_call.1} parent=23 // pred_region
          %s169 = sand.u32 %s83, 1
          %s170 = scalar_lea.sflag [#allocation3], %s169
          %s171 = sand.u32 %s83, 1
          %s172 = smul.addr %s171, 24
          %s173 = scalar_lea.vmem [#allocation8], %s172
          %s175 = ssub.s32 384, 384
          %176 = vsyncadd %s170, %s175
          %s177 = smul.addr %s24, 3
          %s178 = sadd.s32 %s25, %s177
          %s179 = smul.addr %s178, 128
          %s180 = scalar_lea.hbm %s2, %s179
          %s181 = sshll.u32 %s173, 4
          %s182 = int_to_ptr.vmem [resolvable:$true] %s181
          %187 = dma.hbm_to_vmem [thread:$0]  %s180, 384, %s182, %s170, 128, 128, 8
        $region28: #{tpu_custom_call.1} parent=23 // pred_fallthru
          _
      $region24: #{tpu_custom_call.1} parent=5 // pred_fallthru
        _
      %p188 = scmp.le.s32.totalorder 1, %s17
      %p189 = scmp.lt.s32.totalorder %s17, 3
      %p190 = pnand %p188, %p189
      %p191 = pneg %p190
      // Predicated region
      $region29: #{tpu_custom_call.1} parent=5 // pred_check
        _
      $region30: #{tpu_custom_call.1} parent=5 // pred_check_branch
        %193 = sbr.rel (%p190) target = $region32
      $region31: #{tpu_custom_call.1} parent=5 // pred_region
        %s194 = ssub.s32 %s17, 1
        // Predicated region
        $region33: #{tpu_custom_call.1} parent=31 // pred_check
          %p195 = pneg %p50
        $region34: #{tpu_custom_call.1} parent=31 // pred_check_branch
          %197 = sbr.rel (%p195) target = $region36
        $region35: #{tpu_custom_call.1} parent=31 // pred_region
          %198 = dma.done [#allocation5], 16
        $region36: #{tpu_custom_call.1} parent=31 // pred_fallthru
          _
        // Predicated region
        $region37: #{tpu_custom_call.1} parent=31 // pred_check
          %p199 = pneg %p71
        $region38: #{tpu_custom_call.1} parent=31 // pred_check_branch
          %201 = sbr.rel (%p199) target = $region40
        $region39: #{tpu_custom_call.1} parent=31 // pred_region
          %202 = dma.done [#allocation6], 16
        $region40: #{tpu_custom_call.1} parent=31 // pred_fallthru
          _
        %s203 = sand.u32 %s86, 1
        %s204 = scalar_lea.sflag [#allocation3], %s203
        %s205 = sand.u32 %s86, 1
        %s206 = smul.addr %s205, 24
        %s207 = scalar_lea.vmem [#allocation8], %s206
        // Predicated region
        $region41: #{tpu_custom_call.1} parent=31 // pred_check
          %p208 = pneg %p99
        $region42: #{tpu_custom_call.1} parent=31 // pred_check_branch
          %210 = sbr.rel (%p208) target = $region44
        $region43: #{tpu_custom_call.1} parent=31 // pred_region
          %211 = dma.done %s204, 384
        $region44: #{tpu_custom_call.1} parent=31 // pred_fallthru
          _
        %212 = sfence
        %p213 = pneg %p50
        %p214 = pneg %p47
        %p215 = pneg %p71
        %p216 = pneg %p68
        %s217 = sand.u32 %s86, 1
        %s218 = scalar_lea.sflag [#allocation3], %s217
        %s219 = sand.u32 %s86, 1
        %s220 = smul.addr %s219, 24
        %s221 = scalar_lea.vmem [#allocation8], %s220
        %p222 = pneg %p99
        %p223 = pneg %p96
        %p224 = pneg %p127
        %p225 = pneg %p124
        %s226 = sand.u32 %s114, 1
        %s227 = scalar_lea.sflag [#allocation4], %s226
        %s228 = sand.u32 %s114, 1
        %s229 = smul.addr %s228, 8
        %s230 = scalar_lea.vmem [#allocation9], %s229
        %s231 = smul.u32 %s26, 8
        %s232 = smul.u32 %s26, 24
        %v233 = vld [vmem:[%s207] sm:$0xff]
        %s234 = scalar_lea.vmem %s207, 8 [#allocation8]
        %v235 = vld [vmem:[%s234] sm:$0xff]
        %s236 = scalar_lea.vmem %s207, 16 [#allocation8]
        %v237 = vld [vmem:[%s236] sm:$0xff]
        %s238 = sld [smem:[#allocation7 + %s232]]
        %v239 = vstv %s238
        %v240 = vsub.f32 %v233, %v239
        %s241 = sadd.s32 %s232, 1
        %s242 = sld [smem:[#allocation7 + %s241]]
        %v243 = vstv %s242
        %v244 = vsub.f32 %v235, %v243
        %s245 = sadd.s32 %s232, 2
        %s246 = sld [smem:[#allocation7 + %s245]]
        %v247 = vstv %s246
        %v248 = vsub.f32 %v237, %v247
        %v249 = vmul.f32 %v240, %v240
        %v250 = vmul.f32 %v244, %v244
        %v251 = vadd.f32 %v249, %v250
        %v252 = vmul.f32 %v248, %v248
        %v253 = vadd.f32 %v251, %v252
        %v254 = vrsqrt.pop %v253
        %v255 = vmul.f32 %v253, %v254
        %vm256 = vcmp.eq.f32.partialorder %v253, inf
        %v257 = vsel %vm256, %v253, %v255
        %vm258 = vcmp.eq.f32.partialorder %v253, 0.0
        %v259 = vand.u32 %v253, 2147483648
        %v260 = vsel %vm258, %v259, %v257
        %s261 = sld [smem:[#allocation2 + %s231]]
        %v262 = vstv %s261
        %v263 = vsub.f32 %v260, %v262
        %v264 = vmul.f32 %v263, -22.0
        %s265 = sadd.s32 %s232, 3
        %s266 = sld [smem:[#allocation7 + %s265]]
        %v267 = vstv %s266
        %v268 = vsub.f32 %v233, %v267
        %s269 = sadd.s32 %s232, 4
        %s270 = sld [smem:[#allocation7 + %s269]]
        %v271 = vstv %s270
        %v272 = vsub.f32 %v235, %v271
        %s273 = sadd.s32 %s232, 5
        %s274 = sld [smem:[#allocation7 + %s273]]
        %v275 = vstv %s274
        %v276 = vsub.f32 %v237, %v275
        %v277 = vmul.f32 %v268, %v268
        %v278 = vmul.f32 %v272, %v272
        %v279 = vadd.f32 %v277, %v278
        %v280 = vmul.f32 %v276, %v276
        %v281 = vadd.f32 %v279, %v280
        %v282 = vrsqrt.pop %v281
        %v283 = vmul.f32 %v281, %v282
        %vm284 = vcmp.eq.f32.partialorder %v281, inf
        %v285 = vsel %vm284, %v281, %v283
        %vm286 = vcmp.eq.f32.partialorder %v281, 0.0
        %v287 = vand.u32 %v281, 2147483648
        %v288 = vsel %vm286, %v287, %v285
        %s289 = sadd.s32 %s231, 1
        %s290 = sld [smem:[#allocation2 + %s289]]
        %v291 = vstv %s290
        %v292 = vsub.f32 %v288, %v291
        %v293 = vmul.f32 %v292, -22.0
        %s294 = sadd.s32 %s232, 6
        %s295 = sld [smem:[#allocation7 + %s294]]
        %v296 = vstv %s295
        %v297 = vsub.f32 %v233, %v296
        %s298 = sadd.s32 %s232, 7
        %s299 = sld [smem:[#allocation7 + %s298]]
        %v300 = vstv %s299
        %v301 = vsub.f32 %v235, %v300
        %s302 = sadd.s32 %s232, 8
        %s303 = sld [smem:[#allocation7 + %s302]]
        %v304 = vstv %s303
        %v305 = vsub.f32 %v237, %v304
        %v306 = vmul.f32 %v297, %v297
        %v307 = vmul.f32 %v301, %v301
        %v308 = vadd.f32 %v306, %v307
        %v309 = vmul.f32 %v305, %v305
        %v310 = vadd.f32 %v308, %v309
        %v311 = vrsqrt.pop %v310
        %v312 = vmul.f32 %v310, %v311
        %vm313 = vcmp.eq.f32.partialorder %v310, inf
        %v314 = vsel %vm313, %v310, %v312
        %vm315 = vcmp.eq.f32.partialorder %v310, 0.0
        %v316 = vand.u32 %v310, 2147483648
        %v317 = vsel %vm315, %v316, %v314
        %s318 = sadd.s32 %s231, 2
        %s319 = sld [smem:[#allocation2 + %s318]]
        %v320 = vstv %s319
        %v321 = vsub.f32 %v317, %v320
        %v322 = vmul.f32 %v321, -22.0
        %s323 = sadd.s32 %s232, 9
        %s324 = sld [smem:[#allocation7 + %s323]]
        %v325 = vstv %s324
        %v326 = vsub.f32 %v233, %v325
        %s327 = sadd.s32 %s232, 10
        %s328 = sld [smem:[#allocation7 + %s327]]
        %v329 = vstv %s328
        %v330 = vsub.f32 %v235, %v329
        %s331 = sadd.s32 %s232, 11
        %s332 = sld [smem:[#allocation7 + %s331]]
        %v333 = vstv %s332
        %v334 = vsub.f32 %v237, %v333
        %v335 = vmul.f32 %v326, %v326
        %v336 = vmul.f32 %v330, %v330
        %v337 = vadd.f32 %v335, %v336
        %v338 = vmul.f32 %v334, %v334
        %v339 = vadd.f32 %v337, %v338
        %v340 = vrsqrt.pop %v339
        %v341 = vmul.f32 %v339, %v340
        %vm342 = vcmp.eq.f32.partialorder %v339, inf
        %v343 = vsel %vm342, %v339, %v341
        %vm344 = vcmp.eq.f32.partialorder %v339, 0.0
        %v345 = vand.u32 %v339, 2147483648
        %v346 = vsel %vm344, %v345, %v343
        %s347 = sadd.s32 %s231, 3
        %s348 = sld [smem:[#allocation2 + %s347]]
        %v349 = vstv %s348
        %v350 = vsub.f32 %v346, %v349
        %v351 = vmul.f32 %v350, -22.0
        %s352 = sadd.s32 %s232, 12
        %s353 = sld [smem:[#allocation7 + %s352]]
        %v354 = vstv %s353
        %v355 = vsub.f32 %v233, %v354
        %s356 = sadd.s32 %s232, 13
        %s357 = sld [smem:[#allocation7 + %s356]]
        %v358 = vstv %s357
        %v359 = vsub.f32 %v235, %v358
        %s360 = sadd.s32 %s232, 14
        %s361 = sld [smem:[#allocation7 + %s360]]
        %v362 = vstv %s361
        %v363 = vsub.f32 %v237, %v362
        %v364 = vmul.f32 %v355, %v355
        %v365 = vmul.f32 %v359, %v359
        %v366 = vadd.f32 %v364, %v365
        %v367 = vmul.f32 %v363, %v363
        %v368 = vadd.f32 %v366, %v367
        %v369 = vrsqrt.pop %v368
        %v370 = vmul.f32 %v368, %v369
        %vm371 = vcmp.eq.f32.partialorder %v368, inf
        %v372 = vsel %vm371, %v368, %v370
        %vm373 = vcmp.eq.f32.partialorder %v368, 0.0
        %v374 = vand.u32 %v368, 2147483648
        %v375 = vsel %vm373, %v374, %v372
        %s376 = sadd.s32 %s231, 4
        %s377 = sld [smem:[#allocation2 + %s376]]
        %v378 = vstv %s377
        %v379 = vsub.f32 %v375, %v378
        %v380 = vmul.f32 %v379, -22.0
        %s381 = sadd.s32 %s232, 15
        %s382 = sld [smem:[#allocation7 + %s381]]
        %v383 = vstv %s382
        %v384 = vsub.f32 %v233, %v383
        %s385 = sadd.s32 %s232, 16
        %s386 = sld [smem:[#allocation7 + %s385]]
        %v387 = vstv %s386
        %v388 = vsub.f32 %v235, %v387
        %s389 = sadd.s32 %s232, 17
        %s390 = sld [smem:[#allocation7 + %s389]]
        %v391 = vstv %s390
        %v392 = vsub.f32 %v237, %v391
        %v393 = vmul.f32 %v384, %v384
        %v394 = vmul.f32 %v388, %v388
        %v395 = vadd.f32 %v393, %v394
        %v396 = vmul.f32 %v392, %v392
        %v397 = vadd.f32 %v395, %v396
        %v398 = vrsqrt.pop %v397
        %v399 = vmul.f32 %v397, %v398
        %vm400 = vcmp.eq.f32.partialorder %v397, inf
        %v401 = vsel %vm400, %v397, %v399
        %vm402 = vcmp.eq.f32.partialorder %v397, 0.0
        %v403 = vand.u32 %v397, 2147483648
        %v404 = vsel %vm402, %v403, %v401
        %s405 = sadd.s32 %s231, 5
        %s406 = sld [smem:[#allocation2 + %s405]]
        %v407 = vstv %s406
        %v408 = vsub.f32 %v404, %v407
        %v409 = vmul.f32 %v408, -22.0
        %s410 = sadd.s32 %s232, 18
        %s411 = sld [smem:[#allocation7 + %s410]]
        %v412 = vstv %s411
        %v413 = vsub.f32 %v233, %v412
        %s414 = sadd.s32 %s232, 19
        %s415 = sld [smem:[#allocation7 + %s414]]
        %v416 = vstv %s415
        %v417 = vsub.f32 %v235, %v416
        %s418 = sadd.s32 %s232, 20
        %s419 = sld [smem:[#allocation7 + %s418]]
        %v420 = vstv %s419
        %v421 = vsub.f32 %v237, %v420
        %v422 = vmul.f32 %v413, %v413
        %v423 = vmul.f32 %v417, %v417
        %v424 = vadd.f32 %v422, %v423
        %v425 = vmul.f32 %v421, %v421
        %v426 = vadd.f32 %v424, %v425
        %v427 = vrsqrt.pop %v426
        %v428 = vmul.f32 %v426, %v427
        %vm429 = vcmp.eq.f32.partialorder %v426, inf
        %v430 = vsel %vm429, %v426, %v428
        %vm431 = vcmp.eq.f32.partialorder %v426, 0.0
        %v432 = vand.u32 %v426, 2147483648
        %v433 = vsel %vm431, %v432, %v430
        %s434 = sadd.s32 %s231, 6
        %s435 = sld [smem:[#allocation2 + %s434]]
        %v436 = vstv %s435
        %v437 = vsub.f32 %v433, %v436
        %v438 = vmul.f32 %v437, -22.0
        %s439 = sadd.s32 %s232, 21
        %s440 = sld [smem:[#allocation7 + %s439]]
        %v441 = vstv %s440
        %v442 = vsub.f32 %v233, %v441
        %s443 = sadd.s32 %s232, 22
        %s444 = sld [smem:[#allocation7 + %s443]]
        %v445 = vstv %s444
        %v446 = vsub.f32 %v235, %v445
        %s447 = sadd.s32 %s232, 23
        %s448 = sld [smem:[#allocation7 + %s447]]
        %v449 = vstv %s448
        %v450 = vsub.f32 %v237, %v449
        %v451 = vmul.f32 %v442, %v442
        %v452 = vmul.f32 %v446, %v446
        %v453 = vadd.f32 %v451, %v452
        %v454 = vmul.f32 %v450, %v450
        %v455 = vadd.f32 %v453, %v454
        %v456 = vrsqrt.pop %v455
        %v457 = vmul.f32 %v455, %v456
        %vm458 = vcmp.eq.f32.partialorder %v455, inf
        %v459 = vsel %vm458, %v455, %v457
        %vm460 = vcmp.eq.f32.partialorder %v455, 0.0
        %v461 = vand.u32 %v455, 2147483648
        %v462 = vsel %vm460, %v461, %v459
        %s463 = sadd.s32 %s231, 7
        %s464 = sld [smem:[#allocation2 + %s463]]
        %v465 = vstv %s464
        %v466 = vsub.f32 %v462, %v465
        %v467 = vmul.f32 %v466, -22.0
        %v468 = vmax.f32 %v264, %v293
        %v469 = vmax.f32 %v468, %v322
        %v470 = vmax.f32 %v469, %v351
        %v471 = vmax.f32 %v470, %v380
        %v472 = vmax.f32 %v471, %v409
        %v473 = vmax.f32 %v472, %v438
        %v474 = vmax.f32 %v473, %v467
        %v475 = vsub.f32 %v264, %v474
        %v476 = vmul.f32 %v475, 1.442695
        %v477 = vpow.pop %v476
        %v478 = vsub.f32 %v293, %v474
        %v479 = vmul.f32 %v478, 1.442695
        %v480 = vpow.pop %v479
        %v481 = vadd.f32 %v477, %v480
        %v482 = vsub.f32 %v322, %v474
        %v483 = vmul.f32 %v482, 1.442695
        %v484 = vpow.pop %v483
        %v485 = vadd.f32 %v481, %v484
        %v486 = vsub.f32 %v351, %v474
        %v487 = vmul.f32 %v486, 1.442695
        %v488 = vpow.pop %v487
        %v489 = vadd.f32 %v485, %v488
        %v490 = vsub.f32 %v380, %v474
        %v491 = vmul.f32 %v490, 1.442695
        %v492 = vpow.pop %v491
        %v493 = vadd.f32 %v489, %v492
        %v494 = vsub.f32 %v409, %v474
        %v495 = vmul.f32 %v494, 1.442695
        %v496 = vpow.pop %v495
        %v497 = vadd.f32 %v493, %v496
        %v498 = vsub.f32 %v438, %v474
        %v499 = vmul.f32 %v498, 1.442695
        %v500 = vpow.pop %v499
        %v501 = vadd.f32 %v497, %v500
        %v502 = vsub.f32 %v467, %v474
        %v503 = vmul.f32 %v502, 1.442695
        %v504 = vpow.pop %v503
        %v505 = vadd.f32 %v501, %v504
        %v506 = vlog2.pop %v505
        %v507 = vmul.f32 %v506, 0.6931472
        %v508 = vadd.f32 %v474, %v507
        %v509 = vmul.f32 %v508, -0.045454547
        %510 = vst [vmem:[%s230] sm:$0xff] %v509
        %s511 = sand.u32 %s114, 1
        %s512 = scalar_lea.sflag [#allocation4], %s511
        %s513 = sand.u32 %s114, 1
        %s514 = smul.addr %s513, 8
        %s515 = scalar_lea.vmem [#allocation9], %s514
        // Predicated region
        $region45: #{tpu_custom_call.1} parent=31 // pred_check
          %p516 = pneg %p124
        $region46: #{tpu_custom_call.1} parent=31 // pred_check_branch
          %518 = sbr.rel (%p516) target = $region48
        $region47: #{tpu_custom_call.1} parent=31 // pred_region
          %s520 = ssub.s32 128, 128
          %521 = vsyncadd %s512, %s520
          %s522 = sadd.s32 %s27, %s26
          %s523 = smul.addr %s522, 128
          %s524 = scalar_lea.hbm %s3, %s523
          %s526 = sshll.u32 %s515, 4
          %s527 = int_to_ptr.vmem [resolvable:$true] %s526
          %529 = dma.vmem_to_hbm [thread:$0]  %s527, 128, %s524, %s512
        $region48: #{tpu_custom_call.1} parent=31 // pred_fallthru
          _
      $region32: #{tpu_custom_call.1} parent=5 // pred_fallthru
        _
      %p530 = scmp.le.s32.totalorder 2, %s17
      // Predicated region
      $region49: #{tpu_custom_call.1} parent=5 // pred_check
        %p531 = pneg %p530
      $region50: #{tpu_custom_call.1} parent=5 // pred_check_branch
        %533 = sbr.rel (%p531) target = $region52
      $region51: #{tpu_custom_call.1} parent=5 // pred_region
        %s534 = ssub.s32 %s17, 2
        // Predicated region
        $region53: #{tpu_custom_call.1} parent=51 // pred_check
          %p535 = pneg %p130
        $region54: #{tpu_custom_call.1} parent=51 // pred_check_branch
          %537 = sbr.rel (%p535) target = $region56
        $region55: #{tpu_custom_call.1} parent=51 // pred_region
          %s538 = sand.u32 %s115, 1
          %s539 = scalar_lea.sflag [#allocation4], %s538
          %s540 = sand.u32 %s115, 1
          %s541 = smul.addr %s540, 8
          %s542 = scalar_lea.vmem [#allocation9], %s541
          %543 = dma.done %s539, 128
        $region56: #{tpu_custom_call.1} parent=51 // pred_fallthru
          _
      $region52: #{tpu_custom_call.1} parent=5 // pred_fallthru
        _
    $region6: #{tpu_custom_call.1} parent=1 // loop_footer
      %s21 = sadd.s32 1, %s17
    $region7: #{tpu_custom_call.1} parent=1 // loop_footer_branch
      %16 = sbr.rel target = $region3
    $region8: #{tpu_custom_call.1} parent=1 // loop_exit
      _
    %544 = vsyncpa [#allocation3], 1
    %s545 = scalar_lea.sflag [#allocation3], 1
    %546 = vsyncpa %s545, 1
    %547 = vsyncpa [#allocation4], 1
    %s548 = scalar_lea.sflag [#allocation4], 1
    %549 = vsyncpa %s548, 1
    %550 = vsyncpa [#allocation5], 1
    %s551 = scalar_lea.sflag [#allocation5], 1
    %552 = vsyncpa %s551, 1
    %553 = vsyncpa [#allocation6], 1
    %s554 = scalar_lea.sflag [#allocation6], 1
    %555 = vsyncpa %s554, 1

</llo_original>
